<compile_context>
chip_gen: v5e
topology: v5e:2x2
jax: 0.10.0
libtpu: 0.0.40
codegen_flags: <defaults>
</compile_context>

<pallas_src>
import functools

import jax
import jax.numpy as jnp
from jax.experimental import pallas as pl
from jax.experimental.pallas import tpu as pltpu


_LANE = 128
_MAX_TM = 16384                      # double-buffered VMEM at Cout=64, K=48 ~= 11 MiB
_VMEM_LIMIT = 32 * 1024 * 1024       # safe on v5e/v6e (128 MiB) and v7x (64 MiB)


# ---------------------------------------------------------------------------
# Pallas kernel: fused (Cout, K) @ (K, TM) matmul + bias + ReLU
# ---------------------------------------------------------------------------
def _conv_matmul_kernel(w_ref, b_ref, p_ref, o_ref):
    # w_ref: (Cout, K)   bf16 conv weight (resident across the grid)
    # b_ref: (Cout, 1)   f32 bias (resident)
    # p_ref: (K, TM)     bf16 im2col patch tile
    # o_ref: (Cout, TM)  output tile (lane-dense stores)
    acc = jnp.dot(w_ref[...], p_ref[...], preferred_element_type=jnp.float32)
    o_ref[...] = jnp.maximum(acc + b_ref[...], 0.0).astype(o_ref.dtype)


# ---------------------------------------------------------------------------
# Tile selection
# ---------------------------------------------------------------------------
def _aligned_tile(m, n):
    """Largest multiple-of-128 divisor of m (<= _MAX_TM); None -> use flat path."""
    if m % _LANE:
        return None

    def _largest_div(limit):
        d = (min(limit, m) // _LANE) * _LANE
        while d >= _LANE:
            if m % d == 0:
                return d
            d -= _LANE
        return None

    tm = _largest_div(_MAX_TM)
    if tm is not None and n * (m // tm) < 2:
        # Guarantee >=2 grid steps (pipelining overlap + v7x dual TensorCore).
        tm = _largest_div(m // 2)
    if tm is None or tm < 512:
        return None                   # tiles too small -> batch-flattened path
    return tm


def _flat_tile(p):
    """Lane tile for the batch-flattened path: multiple of 128, >=2 grid steps."""
    steps = max(2, pl.cdiv(p, _MAX_TM))
    tm = min(_MAX_TM, _LANE * max(1, pl.cdiv(p, steps * _LANE)))
    p_pad = tm * max(2, pl.cdiv(p, tm))
    return tm, p_pad


# ---------------------------------------------------------------------------
# im2col (glue; fused into the pallas_call input via allow_input_fusion):
# 4x4 / stride-2 / pad-1 patches, NCHW input -> (N, K, OH*OW) with (C, KH, KW)
# feature ordering so it matches weight.reshape(Cout, Cin*KH*KW).
# ---------------------------------------------------------------------------
def _conv_geometry(h, w, kh, kw, stride, pad):
    oh = (h + 2 * pad - kh) // stride + 1
    ow = (w + 2 * pad - kw) // stride + 1
    return oh, ow


def _im2col_nkm(x, kh, kw, stride, pad):
    n, c, h, w = x.shape
    oh, ow = _conv_geometry(h, w, kh, kw, stride, pad)
    xp = jnp.pad(x, ((0, 0), (0, 0), (pad, pad), (pad, pad)))
    cols = []
    for dh in range(kh):
        for dw in range(kw):
            cols.append(xp[:, :, dh: dh + stride * oh: stride,
                                 dw: dw + stride * ow: stride])   # (N, C, OH, OW)
    patches = jnp.stack(cols, axis=2)                    # (N, C, KH*KW, OH, OW)
    return patches.reshape(n, c * kh * kw, oh * ow), oh, ow


# ---------------------------------------------------------------------------
# pallas_call wrappers
# ---------------------------------------------------------------------------
def _fused_per_image(patches, w_mat, bias2d, tm, out_dtype):
    """patches: (N, K, M) bf16, M % tm == 0 -> (N, Cout, M)."""
    n, k, m = patches.shape
    cout = w_mat.shape[0]
    flops = 2 * n * m * k * cout
    bytes_accessed = (n * k * m * patches.dtype.itemsize
                      + cout * k * w_mat.dtype.itemsize + cout * 4
                      + n * cout * m * jnp.dtype(out_dtype).itemsize)
    return pl.pallas_call(
        _conv_matmul_kernel,
        out_shape=jax.ShapeDtypeStruct((n, cout, m), out_dtype),
        grid_spec=pltpu.PrefetchScalarGridSpec(
            num_scalar_prefetch=0,
            grid=(n, m // tm),
            in_specs=[
                pl.BlockSpec((cout, k), lambda b, i: (0, 0)),
                pl.BlockSpec((cout, 1), lambda b, i: (0, 0)),
                pl.BlockSpec((None, k, tm), lambda b, i: (b, 0, i)),
            ],
            out_specs=pl.BlockSpec((None, cout, tm), lambda b, i: (b, 0, i)),
        ),
        compiler_params=pltpu.CompilerParams(
            dimension_semantics=("parallel", "parallel"),
            vmem_limit_bytes=_VMEM_LIMIT,
            allow_input_fusion=[False, False, True],
        ),
        cost_estimate=pl.CostEstimate(
            flops=flops, transcendentals=0, bytes_accessed=bytes_accessed),
    )(w_mat, bias2d, patches)


def _fused_flat(patches, w_mat, bias2d, tm, out_dtype):
    """patches: (K, P) bf16, P % tm == 0 -> (Cout, P). Batch folded into lanes."""
    k, p = patches.shape
    cout = w_mat.shape[0]
    flops = 2 * p * k * cout
    bytes_accessed = (k * p * patches.dtype.itemsize
                      + cout * k * w_mat.dtype.itemsize + cout * 4
                      + cout * p * jnp.dtype(out_dtype).itemsize)
    return pl.pallas_call(
        _conv_matmul_kernel,
        out_shape=jax.ShapeDtypeStruct((cout, p), out_dtype),
        grid_spec=pltpu.PrefetchScalarGridSpec(
            num_scalar_prefetch=0,
            grid=(p // tm,),
            in_specs=[
                pl.BlockSpec((cout, k), lambda i: (0, 0)),
                pl.BlockSpec((cout, 1), lambda i: (0, 0)),
                pl.BlockSpec((k, tm), lambda i: (0, i)),
            ],
            out_specs=pl.BlockSpec((cout, tm), lambda i: (0, i)),
        ),
        compiler_params=pltpu.CompilerParams(
            dimension_semantics=("parallel",),
            vmem_limit_bytes=_VMEM_LIMIT,
            allow_input_fusion=[False, False, True],
        ),
        cost_estimate=pl.CostEstimate(
            flops=flops, transcendentals=0, bytes_accessed=bytes_accessed),
    )(w_mat, bias2d, patches)


# ---------------------------------------------------------------------------
# Generator forward
# ---------------------------------------------------------------------------
@functools.partial(jax.jit, static_argnames=("out_dtype",))
def generator_forward(x, weight, bias, out_dtype=jnp.float32):
    """x: (N, 3, H, W) f32, weight: (64, 3, 4, 4), bias: (64,)
    -> (N, 64, H/2, W/2) in out_dtype (default f32 = module semantics)."""
    cout, cin, kh, kw = weight.shape
    n = x.shape[0]
    k = cin * kh * kw

    w_mat = weight.reshape(cout, k).astype(jnp.bfloat16)
    bias2d = bias.reshape(cout, 1).astype(jnp.float32)

    # bf16 streaming patches halve input HBM traffic; fused into the kernel
    # input by XLA via allow_input_fusion (no separate materialization pass).
    patches, oh, ow = _im2col_nkm(x.astype(jnp.bfloat16), kh, kw, 2, 1)
    m = oh * ow

    tm = _aligned_tile(m, n)
    if tm is not None:
        # Per-image path: (N, Cout, M) blocks, already NCHW-compatible,
        # lane-dense tiles, no padding / post-slice.
        out = _fused_per_image(patches, w_mat, bias2d, tm, out_dtype)
        return out.reshape(n, cout, oh, ow)

    # Batch-flattened fallback (small or non-128-aligned OH*OW): fold batch
    # into the lane axis so stores stay lane-dense and >=2 grid steps exist.
    p = n * m
    tm, p_pad = _flat_tile(p)
    pf = patches.transpose(1, 0, 2).reshape(k, p)        # (K, N*M)
    if p_pad != p:
        pf = jnp.pad(pf, ((0, 0), (0, p_pad - p)))       # padded cols sliced below
    out = _fused_flat(pf, w_mat, bias2d, tm, out_dtype)  # (Cout, P_pad)
    out = out[:, :p].reshape(cout, n, oh, ow).transpose(1, 0, 2, 3)
    return out


def init_params(key):
    """Deterministic PyTorch-like init: U(-1/sqrt(fan_in), 1/sqrt(fan_in))."""
    kw_key, kb_key = jax.random.split(key)
    fan_in = 3 * 4 * 4
    bound = 1.0 / jnp.sqrt(fan_in)
    weight = jax.random.uniform(kw_key, (64, 3, 4, 4), jnp.float32, -bound, bound)
    bias = jax.random.uniform(kb_key, (64,), jnp.float32, -bound, bound)
    return weight, bias


if __name__ == "__main__":
    key = jax.random.PRNGKey(0)
    k_x, k_p = jax.random.split(key)

    x = jax.random.normal(k_x, (2, 3, 16, 16), jnp.float32)
    weight, bias = init_params(k_p)

    out = jax.block_until_ready(generator_forward(x, weight, bias))
    assert out.shape == (2, 64, 8, 8), out.shape

    # Cross-check against XLA's native convolution + ReLU (f32 reference;
    # kernel streams bf16 operands, hence the loose tolerance).
    ref = jax.lax.conv_general_dilated(
        x, weight, window_strides=(2, 2), padding=((1, 1), (1, 1)),
        dimension_numbers=("NCHW", "OIHW", "NCHW"))
    ref = jnp.maximum(ref + bias.reshape(1, -1, 1, 1), 0.0)
    assert jnp.allclose(out, ref, atol=5e-2, rtol=5e-2), float(
        jnp.max(jnp.abs(out - ref)))

    print("KERNEL_OK")
</pallas_src>

<mosaic_0001>
module attributes {stable_mosaic.version = 11 : i64} {
  func.func @_conv_matmul_kernel(%arg0: i32, %arg1: memref<64x48xbf16, #tpu.memory_space<vmem>>, %arg2: memref<64x1xf32, #tpu.memory_space<vmem>>, %arg3: memref<48x128xbf16, #tpu.memory_space<vmem>>, %arg4: memref<64x128xf32, #tpu.memory_space<vmem>>) attributes {dimension_semantics = [#tpu.dimension_semantics<parallel>], iteration_bounds = array<i64: 2>, scalar_prefetch = 0 : i64, scratch_operands = 0 : i64, tpu.core_type = #tpu.core_type<tc>, window_params = [{pipeline_mode = #tpu.pipeline_mode<synchronous>, transform_indices = @transform_0, window_bounds = array<i64: 64, 48>}, {pipeline_mode = #tpu.pipeline_mode<synchronous>, transform_indices = @transform_1, window_bounds = array<i64: 64, 1>}, {transform_indices = @transform_2, window_bounds = array<i64: 48, 128>}, {transform_indices = @transform_3, window_bounds = array<i64: 64, 128>}]} {
    %c0 = arith.constant 0 : index
    %c0_0 = arith.constant 0 : index
    %0 = vector.load %arg1[%c0, %c0_0] : memref<64x48xbf16, #tpu.memory_space<vmem>>, vector<64x48xbf16>
    %c0_1 = arith.constant 0 : index
    %c0_2 = arith.constant 0 : index
    %1 = vector.load %arg3[%c0_1, %c0_2] : memref<48x128xbf16, #tpu.memory_space<vmem>>, vector<48x128xbf16>
    %cst = arith.constant dense<0.000000e+00> : vector<64x128xf32>
    %2 = tpu.matmul %0, %1, %cst {dimension_numbers = #tpu.dot_dimension_numbers<[1], [0], [0], [1], [0, 0, 1, 1], [], []>} : vector<64x48xbf16>, vector<48x128xbf16>, vector<64x128xf32> -> vector<64x128xf32>
    %c0_3 = arith.constant 0 : index
    %c0_4 = arith.constant 0 : index
    %3 = vector.load %arg2[%c0_3, %c0_4] : memref<64x1xf32, #tpu.memory_space<vmem>>, vector<64x1xf32>
    %4 = vector.broadcast %3 : vector<64x1xf32> to vector<64x128xf32>
    %5 = arith.addf %2, %4 : vector<64x128xf32>
    %cst_5 = arith.constant 0.000000e+00 : f32
    %6 = vector.broadcast %cst_5 : f32 to vector<64x128xf32>
    %7 = arith.maximumf %5, %6 : vector<64x128xf32>
    %c0_6 = arith.constant 0 : index
    %c0_7 = arith.constant 0 : index
    %8 = vector.load %arg4[%c0_6, %c0_7] : memref<64x128xf32, #tpu.memory_space<vmem>>, vector<64x128xf32>
    tpu.vector_store %arg4[%c0_6, %c0_7], %7 {strides = array<i32>} : memref<64x128xf32, #tpu.memory_space<vmem>>, vector<64x128xf32>,
    return
  }
  func.func @transform_0(%arg0: i32) -> (i32, i32) {
    %c0_i32 = arith.constant 0 : i32
    %c0_i32_0 = arith.constant 0 : i32
    %c0_i32_1 = arith.constant 0 : i32
    return %c0_i32, %c0_i32_0 : i32, i32
  }
  func.func @transform_1(%arg0: i32) -> (i32, i32) {
    %c0_i32 = arith.constant 0 : i32
    %c0_i32_0 = arith.constant 0 : i32
    %c0_i32_1 = arith.constant 0 : i32
    return %c0_i32, %c0_i32_0 : i32, i32
  }
  func.func @transform_2(%arg0: i32) -> (i32, i32) {
    %c0_i32 = arith.constant 0 : i32
    %c0_i32_0 = arith.constant 0 : i32
    return %c0_i32, %arg0 : i32, i32
  }
  func.func @transform_3(%arg0: i32) -> (i32, i32) {
    %c0_i32 = arith.constant 0 : i32
    %c0_i32_0 = arith.constant 0 : i32
    return %c0_i32, %arg0 : i32, i32
  }
}

</mosaic_0001>

<llo_original>
// kernel: generator_forward.2
$region0: #{generator_forward.2}
  #allocation0 [shape = 'u32[]', space=smem, size = 0x4, offset = 0x4, fixed_abs, tag = 'smem constant byte address 0x4 - core index']
  #allocation1 [shape = 'u32[72,128]{1,0:T(1,128)}', space=vmem, size = 0x9000, scoped, tag = 'internal scratch']
  #allocation2 [shape = 'u32[2048]{0}', space=vmem, size = 0x2000, scoped, tag = 'scoped memory for generator_forward.2']
  #allocation3 [shape = 'u32[2048]{0}', space=vmem, size = 0x2000, scoped, tag = 'scoped memory for generator_forward.2']
  #allocation4 [shape = 'u32[2048]{0}', space=vmem, size = 0x2000, scoped, tag = 'scoped memory for generator_forward.2']
  #allocation5 [shape = 'u32[2048]{0}', space=vmem, size = 0x2000, scoped, tag = 'scoped memory for generator_forward.2']
  #allocation6 [shape = 'u32[2048]{0}', space=vmem, size = 0x2000, scoped, tag = 'scoped memory for generator_forward.2']
  %s0 = inlined_call_operand.vmem [shape: bf16[64,48], index: 0, kind: input, shape index: {}]
  %s1 = inlined_call_operand.vmem [shape: f32[64,1], index: 1, kind: input, shape index: {}]
  %s2 = inlined_call_operand.vmem [shape: bf16[48,128], index: 2, kind: input, shape index: {}]
  %s3 = inlined_call_operand.<no memory space> [shape: bf16[], index: 3, kind: input, shape index: {}]
  %s4 = inlined_call_operand.vmem [shape: f32[64,256], index: 4, kind: output, shape index: {}]
  %s5 = sld [smem:[#allocation0]]
  $region79: #{generator_forward.2} parent=0
    _
  %s7 = ssub.s32 1, %s5
  %s8 = scalar_select 0, %s7, %s5
  %v9 = vstv %s3
  %v10 = vunpack.i.l.bf16 %v9
  %v12 = vunpack.i.h.bf16 %v9
  $region1: #{generator_forward.2} parent=0
    #allocation7 [shape = 'u8[65536]{0}', space=vmem, size = 0x10000, scoped, tag = 'output window, operand 0']
    loop: start=0, step=1, limit=4
    $region2: #{generator_forward.2} parent=1 // loop_pre_header
      _
    $region3: #{generator_forward.2} parent=1 // loop_header
      %s15 = sphi 0, %s19
      %p16 = scmp.ge.s32.totalorder %s15, 4
      %s23 = sphi 0, %s23
      %s25 = sphi 0, %s23
      %s26 = sphi 0, %s25
      %s40 = sphi 0, %s26
      %s44 = sphi 0, %s44
      %s46 = sphi 0, %s44
      %s47 = sphi 0, %s46
      %s61 = sphi 0, %s47
      %s67 = sphi 0, %s69
      %s70 = sphi 0, %s67
      %s71 = sphi 0, %s70
      %s87 = sphi 0, %s71
      %s93 = sphi 0, %s95
      %s96 = sphi 0, %s93
      %s97 = sphi 0, %s96
      %s113 = sphi 0, %s97
    $region4: #{generator_forward.2} parent=1 // loop_header_branch
      %18 = sbr.rel (%p16) target = $region8
    $region5: #{generator_forward.2} parent=1 // loop_body
      %s20 = ssub.s32 %s15, 1
      %s21 = ssub.s32 %s15, 2
      %s22 = sadd.s32 %s15, 1
      %s24 = sadd.s32 %s23, 1
      %p27 = scmp.eq.s32.totalorder %s15, 1
      %p28 = scmp.ne.s32.totalorder %s23, %s25
      %p29 = scmp.eq.s32.totalorder %s15, 0
      %p30 = por %p28, %p29
      %p31 = scmp.ne.s32.totalorder %s23, %s25
      %p32 = scmp.eq.s32.totalorder %s20, 1
      %p33 = por %p31, %p32
      %p34 = scmp.ne.s32.totalorder %s25, %s26
      %p35 = scmp.eq.s32.totalorder %s20, 0
      %p36 = por %p34, %p35
      %p37 = scmp.ne.s32.totalorder %s25, %s26
      %p38 = scmp.eq.s32.totalorder %s21, 1
      %p39 = por %p37, %p38
      %p41 = scmp.ne.s32.totalorder %s26, %s40
      %p42 = scmp.eq.s32.totalorder %s21, 0
      %p43 = por %p41, %p42
      %s45 = sadd.s32 %s44, 1
      %p48 = scmp.eq.s32.totalorder %s15, 1
      %p49 = scmp.ne.s32.totalorder %s44, %s46
      %p50 = scmp.eq.s32.totalorder %s15, 0
      %p51 = por %p49, %p50
      %p52 = scmp.ne.s32.totalorder %s44, %s46
      %p53 = scmp.eq.s32.totalorder %s20, 1
      %p54 = por %p52, %p53
      %p55 = scmp.ne.s32.totalorder %s46, %s47
      %p56 = scmp.eq.s32.totalorder %s20, 0
      %p57 = por %p55, %p56
      %p58 = scmp.ne.s32.totalorder %s46, %s47
      %p59 = scmp.eq.s32.totalorder %s21, 1
      %p60 = por %p58, %p59
      %p62 = scmp.ne.s32.totalorder %s47, %s61
      %p63 = scmp.eq.s32.totalorder %s21, 0
      %p64 = por %p62, %p63
      %s65 = ssub.s32 %s15, %s22
      %p66 = scmp.eq.s32.totalorder %s65, 0
      %s68 = sadd.s32 %s67, 1
      %s69 = scalar_select %p66, %s67, %s68
      %p72 = pneg %p66
      %p73 = scmp.eq.s32.totalorder %s15, 1
      %p74 = por %p72, %p73
      %p75 = scmp.ne.s32.totalorder %s67, %s70
      %p76 = scmp.eq.s32.totalorder %s15, 0
      %p77 = por %p75, %p76
      %p78 = scmp.ne.s32.totalorder %s67, %s70
      %p79 = scmp.eq.s32.totalorder %s20, 1
      %p80 = por %p78, %p79
      %p81 = scmp.ne.s32.totalorder %s70, %s71
      %p82 = scmp.eq.s32.totalorder %s20, 0
      %p83 = por %p81, %p82
      %p84 = scmp.ne.s32.totalorder %s70, %s71
      %p85 = scmp.eq.s32.totalorder %s21, 1
      %p86 = por %p84, %p85
      %p88 = scmp.ne.s32.totalorder %s71, %s87
      %p89 = scmp.eq.s32.totalorder %s21, 0
      %p90 = por %p88, %p89
      %s91 = ssub.s32 %s15, %s22
      %p92 = scmp.eq.s32.totalorder %s91, 0
      %s94 = sadd.s32 %s93, 1
      %s95 = scalar_select %p92, %s93, %s94
      %p98 = pneg %p92
      %p99 = scmp.eq.s32.totalorder %s15, 1
      %p100 = por %p98, %p99
      %p101 = scmp.ne.s32.totalorder %s93, %s96
      %p102 = scmp.eq.s32.totalorder %s15, 0
      %p103 = por %p101, %p102
      %p104 = scmp.ne.s32.totalorder %s93, %s96
      %p105 = scmp.eq.s32.totalorder %s20, 1
      %p106 = por %p104, %p105
      %p107 = scmp.ne.s32.totalorder %s96, %s97
      %p108 = scmp.eq.s32.totalorder %s20, 0
      %p109 = por %p107, %p108
      %p110 = scmp.ne.s32.totalorder %s96, %s97
      %p111 = scmp.eq.s32.totalorder %s21, 1
      %p112 = por %p110, %p111
      %p114 = scmp.ne.s32.totalorder %s97, %s113
      %p115 = scmp.eq.s32.totalorder %s21, 0
      %p116 = por %p114, %p115
      %p117 = scmp.le.s32.totalorder 1, %s15
      %p118 = scmp.lt.s32.totalorder %s15, 3
      %p119 = pnand %p117, %p118
      %p120 = pneg %p119
      // Predicated region
      $region9: #{generator_forward.2} parent=5 // pred_check
        _
      $region10: #{generator_forward.2} parent=5 // pred_check_branch
        %122 = sbr.rel (%p119) target = $region12
      $region11: #{generator_forward.2} parent=5 // pred_region
        %s123 = ssub.s32 %s15, 1
        // Predicated region
        $region13: #{generator_forward.2} parent=11 // pred_check
          %p124 = pneg %p36
        $region14: #{generator_forward.2} parent=11 // pred_check_branch
          %126 = sbr.rel (%p124) target = $region16
        $region15: #{generator_forward.2} parent=11 // pred_region
          _
        $region16: #{generator_forward.2} parent=11 // pred_fallthru
          _
        // Predicated region
        $region17: #{generator_forward.2} parent=11 // pred_check
          %p127 = pneg %p57
        $region18: #{generator_forward.2} parent=11 // pred_check_branch
          %129 = sbr.rel (%p127) target = $region20
        $region19: #{generator_forward.2} parent=11 // pred_region
          _
        $region20: #{generator_forward.2} parent=11 // pred_fallthru
          _
      $region12: #{generator_forward.2} parent=5 // pred_fallthru
        _
      %p130 = scmp.lt.s32.totalorder %s15, 2
      // Predicated region
      $region21: #{generator_forward.2} parent=5 // pred_check
        %p131 = pneg %p130
      $region22: #{generator_forward.2} parent=5 // pred_check_branch
        %133 = sbr.rel (%p131) target = $region24
      $region23: #{generator_forward.2} parent=5 // pred_region
        // Predicated region
        $region25: #{generator_forward.2} parent=23 // pred_check
          %p134 = pneg %p77
        $region26: #{generator_forward.2} parent=23 // pred_check_branch
          %136 = sbr.rel (%p134) target = $region28
        $region27: #{generator_forward.2} parent=23 // pred_region
          %s137 = ssub.s32 1, %s15
          %s138 = smul.u32 24, %s137
          %p139 = scmp.lt.s32.totalorder %s15, 0
          %s140 = scalar_select %p139, %s15, 0
          %s141 = smul.addr %s140, 4
          %s142 = scalar_lea.vmem %s2, %s141
          %s143 = ssub.s32 1, %s15
          %s144 = smul.u32 24, %s143
        $region28: #{generator_forward.2} parent=23 // pred_fallthru
          _
      $region24: #{generator_forward.2} parent=5 // pred_fallthru
        _
      %p145 = scmp.le.s32.totalorder 1, %s15
      %p146 = scmp.lt.s32.totalorder %s15, 3
      %p147 = pnand %p145, %p146
      %p148 = pneg %p147
      // Predicated region
      $region29: #{generator_forward.2} parent=5 // pred_check
        _
      $region30: #{generator_forward.2} parent=5 // pred_check_branch
        %150 = sbr.rel (%p147) target = $region32
      $region31: #{generator_forward.2} parent=5 // pred_region
        #allocation8 [shape = 'u8[12288]{0}', space=vmem, size = 0x3000, dematerialized = true, scoped, tag = 'FusionAdapter Buffer %fusion.1 = bf16[48,256]{1,0:T(8,128)(2,1)} fusion(%param_2.32, %param_3.15), kind=kLoop, calls=%fused_computation.17.clone, metadata={op_name="jit(generator_forward)/jit(_pad)/pad" stack_frame_id=17}']
        %s151 = ssub.s32 %s15, 1
        %p152 = pneg %p36
        %p153 = pneg %p33
        %p154 = pneg %p57
        %p155 = pneg %p54
        %s156 = ssub.s32 1, %s20
        %s157 = smul.u32 24, %s156
        %p158 = scmp.lt.s32.totalorder %s20, 0
        %s159 = scalar_select %p158, %s20, 0
        %s160 = smul.addr %s159, 4
        %s161 = scalar_lea.vmem %s2, %s160
        %p162 = pneg %p83
        %p163 = pneg %p80
        %p164 = pneg %p109
        %p165 = pneg %p106
        %s166 = sand.u32 %s96, 1
        %s167 = sand.u32 %s96, 1
        %s168 = smul.addr %s167, 64
        %s169 = scalar_lea.vmem [#allocation7], %s168
        %s170 = ssub.s32 1, %s20
        %s171 = smul.u32 24, %s170
        %p172 = scmp.lt.s32.totalorder %s20, 0
        %s173 = scalar_select %p172, %s20, 0
        %s174 = smul.addr %s173, 4
        %s175 = scalar_lea.vmem %s2, %s174
        %s176 = ssub.s32 1, %s20
        %s177 = smul.u32 24, %s176
        %s178 = ssub.s32 0, %s20
        %p179 = scmp.lt.s32.totalorder %s178, 0
        %s180 = scalar_select %p179, 0, 255
        %s181 = sshrl.u32 %s180, 1
        %s182 = sor.u32 %s180, %s181
        %s183 = sand.u32 %s182, 85
        %s184 = sshrl.u32 %s183, 1
        %s185 = sor.u32 %s183, %s184
        %s186 = sand.u32 51, %s185
        %s187 = sshrl.u32 %s186, 2
        %s188 = sor.u32 %s186, %s187
        %s189 = sand.u32 15, %s188
        %v190 = vld [vmem:[%s175] sm:%s189]
        %v191 = vunpack.c.l.bf16 %v190
        %v192 = vunpack.c.h.bf16 %v190
        %s193 = ssub.s32 0, %s20
        %v194 = vstv %s193
        %vm195 = vcmp.lt.s32.totalorder %v194, 0
        %v196 = vsel %vm195, %v10, %v191
        %v197 = vpack.c.bf16 0.0, %v196
        %s199 = ssub.s32 16, 1
        %200 = vst [vmem:[#allocation8] sm:%s199] %v197
        %s201 = scalar_lea.vmem %s175, 4
        %s202 = ssub.s32 0, %s20
        %p203 = scmp.lt.s32.totalorder %s202, 0
        %s204 = scalar_select %p203, 0, 255
        %s205 = sshrl.u32 %s204, 1
        %s206 = sor.u32 %s204, %s205
        %s207 = sand.u32 %s206, 85
        %s208 = sshrl.u32 %s207, 1
        %s209 = sor.u32 %s207, %s208
        %s210 = sand.u32 51, %s209
        %s211 = sshrl.u32 %s210, 2
        %s212 = sor.u32 %s210, %s211
        %s213 = sand.u32 15, %s212
        %v214 = vld [vmem:[%s201] sm:%s213]
        %v215 = vunpack.c.l.bf16 %v214
        %v216 = vunpack.c.h.bf16 %v214
        %s217 = ssub.s32 0, %s20
        %v218 = vstv %s217
        %vm219 = vcmp.lt.s32.totalorder %v218, 0
        %v220 = vsel %vm219, %v10, %v215
        %s221 = scalar_lea.vmem [#allocation8], 4
        %v222 = vpack.c.bf16 0.0, %v220
        %s224 = ssub.s32 16, 1
        %225 = vst [vmem:[%s221] sm:%s224] %v222
        %s226 = scalar_lea.vmem %s175, 8
        %s227 = ssub.s32 0, %s20
        %p228 = scmp.lt.s32.totalorder %s227, 0
        %s229 = scalar_select %p228, 0, 255
        %s230 = sshrl.u32 %s229, 1
        %s231 = sor.u32 %s229, %s230
        %s232 = sand.u32 %s231, 85
        %s233 = sshrl.u32 %s232, 1
        %s234 = sor.u32 %s232, %s233
        %s235 = sand.u32 51, %s234
        %s236 = sshrl.u32 %s235, 2
        %s237 = sor.u32 %s235, %s236
        %s238 = sand.u32 15, %s237
        %v239 = vld [vmem:[%s226] sm:%s238]
        %v240 = vunpack.c.l.bf16 %v239
        %v241 = vunpack.c.h.bf16 %v239
        %s242 = ssub.s32 0, %s20
        %v243 = vstv %s242
        %vm244 = vcmp.lt.s32.totalorder %v243, 0
        %v245 = vsel %vm244, %v10, %v240
        %s246 = scalar_lea.vmem [#allocation8], 8
        %v247 = vpack.c.bf16 0.0, %v245
        %s249 = ssub.s32 16, 1
        %250 = vst [vmem:[%s246] sm:%s249] %v247
        %s251 = scalar_lea.vmem %s175, 12
        %s252 = ssub.s32 0, %s20
        %p253 = scmp.lt.s32.totalorder %s252, 0
        %s254 = scalar_select %p253, 0, 255
        %s255 = sshrl.u32 %s254, 1
        %s256 = sor.u32 %s254, %s255
        %s257 = sand.u32 %s256, 85
        %s258 = sshrl.u32 %s257, 1
        %s259 = sor.u32 %s257, %s258
        %s260 = sand.u32 51, %s259
        %s261 = sshrl.u32 %s260, 2
        %s262 = sor.u32 %s260, %s261
        %s263 = sand.u32 15, %s262
        %v264 = vld [vmem:[%s251] sm:%s263]
        %v265 = vunpack.c.l.bf16 %v264
        %v266 = vunpack.c.h.bf16 %v264
        %s267 = ssub.s32 0, %s20
        %v268 = vstv %s267
        %vm269 = vcmp.lt.s32.totalorder %v268, 0
        %v270 = vsel %vm269, %v10, %v265
        %s271 = scalar_lea.vmem [#allocation8], 12
        %v272 = vpack.c.bf16 0.0, %v270
        %s274 = ssub.s32 16, 1
        %275 = vst [vmem:[%s271] sm:%s274] %v272
        %s276 = scalar_lea.vmem %s175, 16
        %s277 = ssub.s32 0, %s20
        %p278 = scmp.lt.s32.totalorder %s277, 0
        %s279 = scalar_select %p278, 0, 255
        %s280 = sshrl.u32 %s279, 1
        %s281 = sor.u32 %s279, %s280
        %s282 = sand.u32 %s281, 85
        %s283 = sshrl.u32 %s282, 1
        %s284 = sor.u32 %s282, %s283
        %s285 = sand.u32 51, %s284
        %s286 = sshrl.u32 %s285, 2
        %s287 = sor.u32 %s285, %s286
        %s288 = sand.u32 15, %s287
        %v289 = vld [vmem:[%s276] sm:%s288]
        %v290 = vunpack.c.l.bf16 %v289
        %v291 = vunpack.c.h.bf16 %v289
        %s292 = ssub.s32 0, %s20
        %v293 = vstv %s292
        %vm294 = vcmp.lt.s32.totalorder %v293, 0
        %v295 = vsel %vm294, %v10, %v290
        %s296 = scalar_lea.vmem [#allocation8], 16
        %v297 = vpack.c.bf16 0.0, %v295
        %s299 = ssub.s32 16, 1
        %300 = vst [vmem:[%s296] sm:%s299] %v297
        %s301 = scalar_lea.vmem %s175, 20
        %s302 = ssub.s32 0, %s20
        %p303 = scmp.lt.s32.totalorder %s302, 0
        %s304 = scalar_select %p303, 0, 255
        %s305 = sshrl.u32 %s304, 1
        %s306 = sor.u32 %s304, %s305
        %s307 = sand.u32 %s306, 85
        %s308 = sshrl.u32 %s307, 1
        %s309 = sor.u32 %s307, %s308
        %s310 = sand.u32 51, %s309
        %s311 = sshrl.u32 %s310, 2
        %s312 = sor.u32 %s310, %s311
        %s313 = sand.u32 15, %s312
        %v314 = vld [vmem:[%s301] sm:%s313]
        %v315 = vunpack.c.l.bf16 %v314
        %v316 = vunpack.c.h.bf16 %v314
        %s317 = ssub.s32 0, %s20
        %v318 = vstv %s317
        %vm319 = vcmp.lt.s32.totalorder %v318, 0
        %v320 = vsel %vm319, %v10, %v315
        %s321 = scalar_lea.vmem [#allocation8], 20
        %v322 = vpack.c.bf16 0.0, %v320
        %s324 = ssub.s32 16, 1
        %325 = vst [vmem:[%s321] sm:%s324] %v322
        %v327 = vld [vmem:[%s0] sm:$0xf]
        %v328 = vld [vmem:[%s0 + $0x4] sm:$0xf]
        %v329 = vld [vmem:[%s0 + $0x8] sm:$0xf]
        %v330 = vld [vmem:[%s0 + $0xc] sm:$0xf]
        %v331 = vld [vmem:[%s0 + $0x10] sm:$0xf]
        %v332 = vld [vmem:[%s0 + $0x14] sm:$0xf]
        %v333 = vld [vmem:[%s0 + $0x18] sm:$0xf]
        %v334 = vld [vmem:[%s0 + $0x1c] sm:$0xf]
        %v335 = vld [vmem:[#allocation8] sm:$0xf]
        %v336 = vld [vmem:[#allocation8 + $0x4] sm:$0xf]
        %v337 = vld [vmem:[#allocation8 + $0x8] sm:$0xf]
        %v338 = vld [vmem:[#allocation8 + $0xc] sm:$0xf]
        %v339 = vld [vmem:[#allocation8 + $0x10] sm:$0xf]
        %v340 = vld [vmem:[#allocation8 + $0x14] sm:$0xf]
        %v341 = vld [vmem:[%s1] sm:$0xff]
        %v342 = vld [vmem:[%s1 + $0x8] sm:$0xff]
        %v343 = vld [vmem:[%s1 + $0x10] sm:$0xff]
        %v344 = vld [vmem:[%s1 + $0x18] sm:$0xff]
        %v345 = vld [vmem:[%s1 + $0x20] sm:$0xff]
        %v346 = vld [vmem:[%s1 + $0x28] sm:$0xff]
        %v347 = vld [vmem:[%s1 + $0x30] sm:$0xff]
        %v348 = vld [vmem:[%s1 + $0x38] sm:$0xff]
        %350 = vset.pattern.permute.xlu0 0
        %351 = vperm.xlu0 %350, %v341
        %v352 = vpop.permute.xlu0 %351
        %355 = vset.pattern.permute.xlu0 0
        %356 = vperm.xlu0 %355, %v342
        %v357 = vpop.permute.xlu0 %356
        %360 = vset.pattern.permute.xlu0 0
        %361 = vperm.xlu0 %360, %v343
        %v362 = vpop.permute.xlu0 %361
        %365 = vset.pattern.permute.xlu0 0
        %366 = vperm.xlu0 %365, %v344
        %v367 = vpop.permute.xlu0 %366
        %370 = vset.pattern.permute.xlu0 0
        %371 = vperm.xlu0 %370, %v345
        %v372 = vpop.permute.xlu0 %371
        %375 = vset.pattern.permute.xlu0 0
        %376 = vperm.xlu0 %375, %v346
        %v377 = vpop.permute.xlu0 %376
        %380 = vset.pattern.permute.xlu0 0
        %381 = vperm.xlu0 %380, %v347
        %v382 = vpop.permute.xlu0 %381
        %385 = vset.pattern.permute.xlu0 0
        %386 = vperm.xlu0 %385, %v348
        %v387 = vpop.permute.xlu0 %386
        %v397 = vunpack.c.l.b16 %v327
        %v398 = vunpack.c.l.b16 %v328
        %v399 = vunpack.c.l.b16 %v329
        %v400 = vunpack.c.l.b16 %v330
        %v401 = vunpack.c.l.b16 %v331
        %v402 = vunpack.c.l.b16 %v332
        %v403 = vunpack.c.l.b16 %v333
        %v404 = vunpack.c.l.b16 %v334
        %v405 = vpack.c.b16 %v398, %v397
        %v406 = vpack.c.b16 %v400, %v399
        %v407 = vpack.c.b16 %v402, %v401
        %v408 = vpack.c.b16 %v404, %v403
        %v415 = vunpack.c.l.b16 %v335
        %v416 = vunpack.c.l.b16 %v336
        %v417 = vunpack.c.l.b16 %v337
        %v418 = vunpack.c.l.b16 %v338
        %v419 = vunpack.c.l.b16 %v339
        %v420 = vunpack.c.l.b16 %v340
        %v421 = vpack.c.b16 %v416, %v415
        %v422 = vpack.c.b16 %v418, %v417
        %v423 = vpack.c.b16 %v420, %v419
        %vm427 = vcmask 392192
        %v429 = vsel %vm427, %v405, 0
        %v432 = vsel %vm427, %v406, 0
        %v435 = vsel %vm427, %v407, 0
        %v438 = vsel %vm427, %v408, 0
        %440 = vmatpush.bf16.msra.mxu0 0
        %441 = vmatpush.bf16.msra.mxu0 0
        %442 = vmatpush.bf16.msra.mxu0 0
        %443 = vmatpush.bf16.msra.mxu0 0
        %444 = vmatpush.bf16.msra.mxu0 0
        %445 = vmatpush.bf16.msra.mxu0 %v423
        %446 = vmatpush.bf16.msra.mxu0 %v422
        %447 = vmatpush.bf16.msra.mxu0 %v421
        %448 = vmatmul.bf16.gmra.mxu0 %v429
        %v449 = vpop.f32.mrf.mxu0
        %v450 = vadd.f32 %v352, %v449
        %v451 = vpop.f32.mrf.mxu0
        %v452 = vadd.f32 %v357, %v451
        %453 = vmatmul.bf16.gmra.mxu0 %v432
        %v454 = vpop.f32.mrf.mxu0
        %v455 = vadd.f32 %v362, %v454
        %v456 = vpop.f32.mrf.mxu0
        %v457 = vadd.f32 %v367, %v456
        %458 = vmatmul.bf16.gmra.mxu0 %v435
        %v459 = vpop.f32.mrf.mxu0
        %v460 = vadd.f32 %v372, %v459
        %v461 = vpop.f32.mrf.mxu0
        %v462 = vadd.f32 %v377, %v461
        %463 = vmatmul.bf16.gmra.mxu0 %v438
        %v464 = vpop.f32.mrf.mxu0
        %v465 = vadd.f32 %v382, %v464
        %v466 = vpop.f32.mrf.mxu0
        %v467 = vadd.f32 %v387, %v466
        %468 = vdwg.mxu0
        %v469 = vmax.f32 %v450, 0.0
        %v470 = vmax.f32 %v452, 0.0
        %v471 = vmax.f32 %v455, 0.0
        %v472 = vmax.f32 %v457, 0.0
        %v473 = vmax.f32 %v460, 0.0
        %v474 = vmax.f32 %v462, 0.0
        %v475 = vmax.f32 %v465, 0.0
        %v476 = vmax.f32 %v467, 0.0
        %477 = vst [vmem:[%s169] sm:$0xff] %v469
        %478 = vst [vmem:[%s169 + $0x8] sm:$0xff] %v470
        %479 = vst [vmem:[%s169 + $0x10] sm:$0xff] %v471
        %480 = vst [vmem:[%s169 + $0x18] sm:$0xff] %v472
        %481 = vst [vmem:[%s169 + $0x20] sm:$0xff] %v473
        %482 = vst [vmem:[%s169 + $0x28] sm:$0xff] %v474
        %483 = vst [vmem:[%s169 + $0x30] sm:$0xff] %v475
        %484 = vst [vmem:[%s169 + $0x38] sm:$0xff] %v476
        %s485 = sand.u32 %s96, 1
        %s486 = sand.u32 %s96, 1
        %s487 = smul.addr %s486, 64
        %s488 = scalar_lea.vmem [#allocation7], %s487
        // Predicated region
        $region33: #{generator_forward.2} parent=31 // pred_check
          %p489 = pneg %p106
        $region34: #{generator_forward.2} parent=31 // pred_check_branch
          %491 = sbr.rel (%p489) target = $region36
        $region35: #{generator_forward.2} parent=31 // pred_region
          %s492 = smul.addr %s20, 8
          %s493 = scalar_lea.vmem %s4, %s492
          // Predicated region
          $region37: #{generator_forward.2} parent=35 // pred_check
            _
          $region38: #{generator_forward.2} parent=35 // pred_check_branch
            %495 = sbr.rel (0) target = $region40
          $region39: #{generator_forward.2} parent=35 // pred_region
            // Predicated region
            $region41: #{generator_forward.2} parent=39 // pred_check
              _
            $region42: #{generator_forward.2} parent=39 // pred_check_branch
              %497 = sbr.rel (0) target = $region44
            $region43: #{generator_forward.2} parent=39 // pred_region
              // Predicated region
              $region56: #{generator_forward.2} parent=43 // pred_check
                _
              $region57: #{generator_forward.2} parent=43 // pred_check_branch
                %527 = sbr.rel (0) target = $region59
              $region58: #{generator_forward.2} parent=43 // pred_region
                loop: start=0, step=1, limit=1
                $region60: #{generator_forward.2} parent=58 // loop_pre_header
                  _
                $region61: #{generator_forward.2} parent=58 // loop_header
                  %s529 = sphi 0, %s533
                  %p530 = scmp.ge.s32.totalorder %s529, 1
                  %s534 = sphi %s488, %s488
                  %s535 = sphi %s493, %s493
                $region62: #{generator_forward.2} parent=58 // loop_header_branch
                  %532 = sbr.rel (%p530) target = $region66
                $region63: #{generator_forward.2} parent=58 // loop_body
                  %v536 = vld [vmem:[%s534] sm:$0xff]
                  %537 = vst [vmem:[%s535] sm:$0xff] %v536
                  %v538 = vld [vmem:[%s534 + $0x8] sm:$0xff]
                  %539 = vst [vmem:[%s535 + $0x10] sm:$0xff] %v538
                  %v540 = vld [vmem:[%s534 + $0x10] sm:$0xff]
                  %541 = vst [vmem:[%s535 + $0x20] sm:$0xff] %v540
                  %v542 = vld [vmem:[%s534 + $0x18] sm:$0xff]
                  %543 = vst [vmem:[%s535 + $0x30] sm:$0xff] %v542
                  %v544 = vld [vmem:[%s534 + $0x20] sm:$0xff]
                  %545 = vst [vmem:[%s535 + $0x40] sm:$0xff] %v544
                  %v546 = vld [vmem:[%s534 + $0x28] sm:$0xff]
                  %547 = vst [vmem:[%s535 + $0x50] sm:$0xff] %v546
                  %v548 = vld [vmem:[%s534 + $0x30] sm:$0xff]
                  %549 = vst [vmem:[%s535 + $0x60] sm:$0xff] %v548
                  %v550 = vld [vmem:[%s534 + $0x38] sm:$0xff]
                  %551 = vst [vmem:[%s535 + $0x70] sm:$0xff] %v550
                $region64: #{generator_forward.2} parent=58 // loop_footer
                  %s533 = sadd.s32 1, %s529
                $region65: #{generator_forward.2} parent=58 // loop_footer_branch
                  %528 = sbr.rel target = $region61
                $region66: #{generator_forward.2} parent=58 // loop_exit
                  _
              $region59: #{generator_forward.2} parent=43 // pred_fallthru
                _
              // Predicated region
              $region67: #{generator_forward.2} parent=43 // pred_check
                _
              $region68: #{generator_forward.2} parent=43 // pred_check_branch
                %553 = sbr.rel target = $region70
              $region69: #{generator_forward.2} parent=43 // pred_region
                _
              $region70: #{generator_forward.2} parent=43 // pred_fallthru
                _
            $region44: #{generator_forward.2} parent=39 // pred_fallthru
              _
            // Predicated region
            $region45: #{generator_forward.2} parent=39 // pred_check
              _
            $region46: #{generator_forward.2} parent=39 // pred_check_branch
              %499 = sbr.rel target = $region48
            $region47: #{generator_forward.2} parent=39 // pred_region
              %s501 = ssub.s32 256, 1
              loop: start=0, step=1, limit=1
              $region49: #{generator_forward.2} parent=47 // loop_pre_header
                _
              $region50: #{generator_forward.2} parent=47 // loop_header
                %s503 = sphi 0, %s507
                %p504 = scmp.ge.s32.totalorder %s503, 1
                %s508 = sphi %s488, %s488
                %s509 = sphi %s493, %s493
              $region51: #{generator_forward.2} parent=47 // loop_header_branch
                %506 = sbr.rel (%p504) target = $region55
              $region52: #{generator_forward.2} parent=47 // loop_body
                %v510 = vld [vmem:[%s508] sm:%s501]
                %511 = vst [vmem:[%s509] sm:%s501] %v510
                %v512 = vld [vmem:[%s508 + $0x8] sm:%s501]
                %513 = vst [vmem:[%s509 + $0x10] sm:%s501] %v512
                %v514 = vld [vmem:[%s508 + $0x10] sm:%s501]
                %515 = vst [vmem:[%s509 + $0x20] sm:%s501] %v514
                %v516 = vld [vmem:[%s508 + $0x18] sm:%s501]
                %517 = vst [vmem:[%s509 + $0x30] sm:%s501] %v516
                %v518 = vld [vmem:[%s508 + $0x20] sm:%s501]
                %519 = vst [vmem:[%s509 + $0x40] sm:%s501] %v518
                %v520 = vld [vmem:[%s508 + $0x28] sm:%s501]
                %521 = vst [vmem:[%s509 + $0x50] sm:%s501] %v520
                %v522 = vld [vmem:[%s508 + $0x30] sm:%s501]
                %523 = vst [vmem:[%s509 + $0x60] sm:%s501] %v522
                %v524 = vld [vmem:[%s508 + $0x38] sm:%s501]
                %525 = vst [vmem:[%s509 + $0x70] sm:%s501] %v524
              $region53: #{generator_forward.2} parent=47 // loop_footer
                %s507 = sadd.s32 1, %s503
              $region54: #{generator_forward.2} parent=47 // loop_footer_branch
                %502 = sbr.rel target = $region50
              $region55: #{generator_forward.2} parent=47 // loop_exit
                _
            $region48: #{generator_forward.2} parent=39 // pred_fallthru
              _
          $region40: #{generator_forward.2} parent=35 // pred_fallthru
            _
          %554 = vnop
        $region36: #{generator_forward.2} parent=31 // pred_fallthru
          _
      $region32: #{generator_forward.2} parent=5 // pred_fallthru
        _
      %p555 = scmp.le.s32.totalorder 2, %s15
      // Predicated region
      $region71: #{generator_forward.2} parent=5 // pred_check
        %p556 = pneg %p555
      $region72: #{generator_forward.2} parent=5 // pred_check_branch
        %558 = sbr.rel (%p556) target = $region74
      $region73: #{generator_forward.2} parent=5 // pred_region
        %s559 = ssub.s32 %s15, 2
        // Predicated region
        $region75: #{generator_forward.2} parent=73 // pred_check
          %p560 = pneg %p112
        $region76: #{generator_forward.2} parent=73 // pred_check_branch
          %562 = sbr.rel (%p560) target = $region78
        $region77: #{generator_forward.2} parent=73 // pred_region
          %s563 = sand.u32 %s97, 1
          %s564 = sand.u32 %s97, 1
          %s565 = smul.addr %s564, 64
          %s566 = scalar_lea.vmem [#allocation7], %s565
        $region78: #{generator_forward.2} parent=73 // pred_fallthru
          _
      $region74: #{generator_forward.2} parent=5 // pred_fallthru
        _
    $region6: #{generator_forward.2} parent=1 // loop_footer
      %s19 = sadd.s32 1, %s15
    $region7: #{generator_forward.2} parent=1 // loop_footer_branch
      %14 = sbr.rel target = $region3
    $region8: #{generator_forward.2} parent=1 // loop_exit
      _

</llo_original>
